<compile_context>
chip_gen: v7x
topology: tpu7x:2x2x1
jax: 0.10.0
libtpu: 0.0.40
codegen_flags: <defaults>
</compile_context>

<pallas_src>
import jax
import jax.numpy as jnp
from jax import lax
from jax.experimental import pallas as pl
from jax.experimental.pallas import tpu as pltpu


def _edge_matmul_kernel(x_ref, w_ref, p_ref):
    """Grid step (m, j, k): p[m, j] += x[m, k] @ w[j, k].T (accumulate in output)."""
    k = pl.program_id(2)

    @pl.when(k == 0)
    def _():
        p_ref[...] = jnp.zeros_like(p_ref)

    # x tile (tm, tk) contracted with w tile (tn, tk) along K (dim 1 of both):
    # exactly x @ w.T, with the transposed RHS consumed natively by the MXU.
    p_ref[...] += lax.dot_general(
        x_ref[...],
        w_ref[...],
        dimension_numbers=(((1,), (1,)), ((), ())),
        preferred_element_type=jnp.float32,
    )


def _round_up(x, m):
    return ((x + m - 1) // m) * m


def _cdiv(a, b):
    return (a + b - 1) // b


def _largest_aligned_divisor(dim, cap, align):
    """Largest t <= cap with t % align == 0 and dim % t == 0, else None."""
    cap = max(align, (min(cap, dim) // align) * align)
    t = cap
    while t >= align:
        if dim % t == 0:
            return t
        t -= align
    return None


def _vmem_capacity_bytes():
    """Best-effort per-core VMEM capacity; conservative (v7x) if unknown."""
    try:
        info = pltpu.get_tpu_info()
        for name in ("vmem_capacity_bytes", "vmem_size_bytes", "vmem_bytes"):
            v = getattr(info, name, None)
            if v:
                return int(v)
    except Exception:
        pass
    return 64 << 20


def edge_forward(x_nchw, weight, *, tm=None, tn=None, tk=None, compute_dtype=None):
    """p = reshape(x, (B, -1)) @ weight.T  (nn.Linear, no bias, sample=False).

    x_nchw : (B, C, H, W) float32
    weight : (out_features, in_features) float32 (PyTorch nn.Linear layout)
    returns: (B, out_features) float32
    """
    B = x_nchw.shape[0]
    x_flat = x_nchw.reshape(B, -1)                 # (B, K)
    K = x_flat.shape[1]
    N, K_w = weight.shape
    assert K_w == K, "weight shape must be (out_features, in_features)"

    vmem_cap = _vmem_capacity_bytes()
    big_vmem = vmem_cap >= (100 << 20)             # v5e / v6e: 128 MiB; v7x: 64 MiB

    # Generation-aware tile targets.  The weight stream (tn*tk) is the large
    # stream and must stay big; shrink the batch/output tile first on v7x.
    tm_max = tm or (512 if big_vmem else 256)
    tn_max = tn or (2048 if big_vmem else 1024)
    tk_max = tk or 2048
    tm_max = max(8, _round_up(tm_max, 8))
    tn_max = max(128, _round_up(tn_max, 128))
    tk_max = max(128, _round_up(tk_max, 128))

    # ---- M (batch) tile: balanced split, never pad x. Edge blocks are masked.
    if B <= tm_max:
        tm = min(tm_max, _round_up(B, 8))
    else:
        n_m = _cdiv(B, tm_max)
        tm = _round_up(_cdiv(B, n_m), 8)

    # ---- K (reduction) tile: must divide K exactly (or zero-pad K as fallback).
    pad_k = 0
    if K <= tk_max:
        tk = K                                     # full-extent K block
    else:
        tk_div = _largest_aligned_divisor(K, tk_max, 128)
        if tk_div is not None and tk_div >= 512:
            tk = tk_div
        else:
            tk = tk_max                            # rare: zero-pad K (correct for the sum)
            pad_k = _round_up(K, tk) - K

    # ---- N tile: never pad the weight slab; partial edge N blocks are masked.
    if N <= tn_max:
        tn = N
    else:
        tn = _largest_aligned_divisor(N, tn_max, 128) or tn_max
    # Keep >=2 programs on the "parallel" j axis when the batch grid collapses,
    # so 2-TC chips can shard work across TensorCores.
    if _cdiv(B, tm) == 1 and _cdiv(N, tn) < 2 and N >= 256:
        tn = _largest_aligned_divisor(N, N // 2, 128) or max(
            128, _round_up(_cdiv(N, 2), 128)
        )

    x_p, w_p = x_flat, weight
    if compute_dtype is not None:
        x_p = x_p.astype(compute_dtype)
        w_p = w_p.astype(compute_dtype)
    if pad_k:
        x_p = jnp.pad(x_p, ((0, 0), (0, pad_k)))
        w_p = jnp.pad(w_p, ((0, 0), (0, pad_k)))
    Kp = K + pad_k

    grid = (_cdiv(B, tm), _cdiv(N, tn), Kp // tk)

    # VMEM budget: 3x weight buffer + 2x x buffer + 2x f32 output buffer, with
    # headroom, capped below the physical capacity of this generation.
    in_item = jnp.dtype(x_p.dtype).itemsize
    w_bufs = 3
    tile_bytes = (w_bufs * tn * tk + 2 * tm * tk) * in_item + 2 * tm * tn * 4
    vmem_limit = min(max(tile_bytes + (8 << 20), 32 << 20), int(vmem_cap * 0.9))

    cost = pl.CostEstimate(
        flops=2 * B * N * K,
        transcendentals=0,
        bytes_accessed=in_item * (B * K + N * K) + 4 * B * N,
    )

    def build(weight_buffer_count):
        if weight_buffer_count is None:
            w_spec = pl.BlockSpec((tn, tk), lambda m, j, k: (j, k))
        else:
            w_spec = pl.BlockSpec(
                (tn, tk),
                lambda m, j, k: (j, k),
                pipeline_mode=pl.Buffered(weight_buffer_count),
            )
        return pl.pallas_call(
            _edge_matmul_kernel,
            out_shape=jax.ShapeDtypeStruct((B, N), jnp.float32),
            grid_spec=pltpu.PrefetchScalarGridSpec(
                num_scalar_prefetch=0,
                grid=grid,
                in_specs=[
                    # x tile: batch-slice m, K-slice k
                    pl.BlockSpec((tm, tk), lambda m, j, k: (m, k)),
                    # weight tile in native (N, K) layout: N-slice j, K-slice k
                    w_spec,
                ],
                # output tile resident across k (accumulator).
                out_specs=pl.BlockSpec((tm, tn), lambda m, j, k: (m, j)),
            ),
            compiler_params=pltpu.CompilerParams(
                dimension_semantics=("parallel", "parallel", "arbitrary"),
                vmem_limit_bytes=int(vmem_limit),
            ),
            cost_estimate=cost,
        )

    try:
        return build(w_bufs)(x_p, w_p)
    except Exception:
        # pipeline_mode / pl.Buffered rejected on this jax build: use the
        # default 2-deep pipeline (same numerics, slightly less DMA overlap).
        return build(None)(x_p, w_p)


# TODO(synk): out_layer.sample / in_layer.sample (the sample=True branch) live
# in an external Layer class not provided here; only the linear map is kernelized.


if __name__ == "__main__":
    key = jax.random.PRNGKey(0)
    kx, kw = jax.random.split(key)

    # Small NCHW input consistent with the module's reshape(x.size(0), -1)
    B, C, H, W = 2, 4, 16, 16
    in_features = C * H * W          # 1024  (lay_in.shape)
    out_features = 256               # lay_out.shape

    x = jax.random.normal(kx, (B, C, H, W), dtype=jnp.float32)
    # Deterministic "pretrained" weights, PyTorch nn.Linear layout (out, in)
    weight = 0.05 * jax.random.normal(
        kw, (out_features, in_features), dtype=jnp.float32
    )

    p = edge_forward(x, weight)
    jax.block_until_ready(p)

    # Correctness check against plain-JAX reference of nn.Linear (no bias)
    p_ref = x.reshape(B, -1) @ weight.T
    assert p.shape == (B, out_features)
    assert jnp.allclose(p, p_ref, atol=1e-5, rtol=1e-5), "mismatch vs reference"

    print("KERNEL_OK")
</pallas_src>

<mosaic_0001>
module attributes {stable_mosaic.version = 11 : i64} {
  func.func @_edge_matmul_kernel(%arg0: i32, %arg1: i32, %arg2: i32, %arg3: memref<8x1024xf32, #tpu.memory_space<vmem>>, %arg4: memref<128x1024xf32, #tpu.memory_space<vmem>>, %arg5: memref<8x128xf32, #tpu.memory_space<vmem>>) attributes {dimension_semantics = [#tpu.dimension_semantics<parallel>, #tpu.dimension_semantics<parallel>, #tpu.dimension_semantics<arbitrary>], iteration_bounds = array<i64: 1, 2, 1>, scalar_prefetch = 0 : i64, scratch_operands = 0 : i64, tpu.core_type = #tpu.core_type<tc>, window_params = [{transform_indices = @transform_0, window_bounds = array<i64: 8, 1024>}, {transform_indices = @transform_1, window_bounds = array<i64: 128, 1024>}, {transform_indices = @transform_2, window_bounds = array<i64: 8, 128>}]} {
    %c0_i32 = arith.constant 0 : i32
    %0 = arith.cmpi eq, %arg2, %c0_i32 : i32
    %1 = arith.extui %0 : i1 to i32
    %c0_i32_0 = arith.constant 0 : i32
    %2 = arith.cmpi ne, %1, %c0_i32_0 : i32
    scf.if %2 {
      %cst_8 = arith.constant 0.000000e+00 : f32
      %9 = vector.broadcast %cst_8 : f32 to vector<8x128xf32>
      %c0_9 = arith.constant 0 : index
      %c0_10 = arith.constant 0 : index
      %10 = vector.load %arg5[%c0_9, %c0_10] : memref<8x128xf32, #tpu.memory_space<vmem>>, vector<8x128xf32>
      tpu.vector_store %arg5[%c0_9, %c0_10], %9 {strides = array<i32>} : memref<8x128xf32, #tpu.memory_space<vmem>>, vector<8x128xf32>,
    } else {
    }
    %c0 = arith.constant 0 : index
    %c0_1 = arith.constant 0 : index
    %3 = vector.load %arg5[%c0, %c0_1] : memref<8x128xf32, #tpu.memory_space<vmem>>, vector<8x128xf32>
    %c0_2 = arith.constant 0 : index
    %c0_3 = arith.constant 0 : index
    %4 = vector.load %arg3[%c0_2, %c0_3] : memref<8x1024xf32, #tpu.memory_space<vmem>>, vector<8x1024xf32>
    %c0_4 = arith.constant 0 : index
    %c0_5 = arith.constant 0 : index
    %5 = vector.load %arg4[%c0_4, %c0_5] : memref<128x1024xf32, #tpu.memory_space<vmem>>, vector<128x1024xf32>
    %cst = arith.constant dense<0.000000e+00> : vector<8x128xf32>
    %6 = tpu.matmul %4, %5, %cst {dimension_numbers = #tpu.dot_dimension_numbers<[1], [1], [0], [0], [0, 0, 1, 0], [], []>} : vector<8x1024xf32>, vector<128x1024xf32>, vector<8x128xf32> -> vector<8x128xf32>
    %7 = arith.addf %3, %6 : vector<8x128xf32>
    %c0_6 = arith.constant 0 : index
    %c0_7 = arith.constant 0 : index
    %8 = vector.load %arg5[%c0_6, %c0_7] : memref<8x128xf32, #tpu.memory_space<vmem>>, vector<8x128xf32>
    tpu.vector_store %arg5[%c0_6, %c0_7], %7 {strides = array<i32>} : memref<8x128xf32, #tpu.memory_space<vmem>>, vector<8x128xf32>,
    return
  }
  func.func @transform_0(%arg0: i32, %arg1: i32, %arg2: i32) -> (i32, i32) {
    %c0_i32 = arith.constant 0 : i32
    return %arg0, %arg2 : i32, i32
  }
  func.func @transform_1(%arg0: i32, %arg1: i32, %arg2: i32) -> (i32, i32) {
    %c0_i32 = arith.constant 0 : i32
    return %arg1, %arg2 : i32, i32
  }
  func.func @transform_2(%arg0: i32, %arg1: i32, %arg2: i32) -> (i32, i32) {
    %c0_i32 = arith.constant 0 : i32
    return %arg0, %arg1 : i32, i32
  }
}

</mosaic_0001>

<llo_original>
// kernel: tpu_custom_call.1
$region0: #{tpu_custom_call.1}
  #allocation0 [shape = 'u32[]', space=smem, size = 0x4, offset = 0x4, fixed_abs, tag = 'smem constant byte address 0x4 - core index']
  #allocation1 [shape = 'u32[144,128]{1,0:T(1,128)}', space=vmem, size = 0x12000, scoped, tag = 'internal scratch']
  %s0 = inlined_call_operand.hbm [shape: f32[2,1024], index: 0, kind: input, shape index: {}]
  %s1 = inlined_call_operand.hbm [shape: f32[256,1024], index: 1, kind: input, shape index: {}]
  %s2 = inlined_call_operand.hbm [shape: f32[2,256], index: 2, kind: output, shape index: {}]
  %s3 = sld [smem:[#allocation0]]
  $region53: #{tpu_custom_call.1} parent=0
    _
  %s5 = ssub.s32 1, %s3
  %s6 = scalar_select 0, %s5, %s3
  $region1: #{tpu_custom_call.1} parent=0
    #allocation2 [shape = 'u8[32768]{0}', space=vmem, size = 0x8000, scoped, tag = 'input window, operand 0, single buffered']
    #allocation3 [shape = 's32[2]{0}', space=sflag, size = 0x8, scoped, tag = 'scoped memory for tpu_custom_call.1']
    #allocation4 [shape = 's32[2]{0}', space=sflag, size = 0x8, scoped, tag = 'scoped memory for tpu_custom_call.1']
    #allocation5 [shape = 'u8[1048576]{0}', space=vmem, size = 0x100000, scoped, tag = 'input window, operand 1']
    #allocation6 [shape = 's32[2]{0}', space=sflag, size = 0x8, scoped, tag = 'scoped memory for tpu_custom_call.1']
    #allocation7 [shape = 'u8[8192]{0}', space=vmem, size = 0x2000, scoped, tag = 'output window, operand 0']
    %7 = vsyncpa [#allocation3], 0
    %8 = vsyncpa [#allocation6], 0
    %s9 = scalar_lea.sflag [#allocation6], 1
    %10 = vsyncpa %s9, 0
    %11 = vsyncpa [#allocation4], 0
    %s12 = scalar_lea.sflag [#allocation4], 1
    %13 = vsyncpa %s12, 0
    loop: start=0, step=1, limit=4
    $region2: #{tpu_custom_call.1} parent=1 // loop_pre_header
      _
    $region3: #{tpu_custom_call.1} parent=1 // loop_header
      %s15 = sphi 0, %s19
      %p16 = scmp.ge.s32.totalorder %s15, 4
      %s22 = sphi 0, %s41
      %s23 = sphi 0, %s37
      %s24 = sphi 0, %s33
      %s25 = sphi 0, %s22
      %s26 = sphi 0, %s23
      %s27 = sphi 0, %s24
      %s28 = sphi 0, %s25
      %s29 = sphi 0, %s26
      %s30 = sphi 0, %s27
      %s46 = sphi 0, %s48
      %s49 = sphi 0, %s46
      %s50 = sphi 0, %s49
      %s66 = sphi 0, %s50
      %s74 = sphi 0, %s76
      %s77 = sphi 0, %s74
      %s78 = sphi 0, %s77
      %s94 = sphi 0, %s78
      %s102 = sphi 0, %s104
      %s105 = sphi 0, %s102
      %s106 = sphi 0, %s105
      %s122 = sphi 0, %s106
    $region4: #{tpu_custom_call.1} parent=1 // loop_header_branch
      %18 = sbr.rel (%p16) target = $region8
    $region5: #{tpu_custom_call.1} parent=1 // loop_body
      %s20 = ssub.s32 %s15, 1
      %s21 = ssub.s32 %s15, 2
      %s31 = sadd.s32 1, %s24
      %p32 = scmp.ge.s32.totalorder %s31, 1
      %s33 = scalar_select %p32, 0, %s31
      %s34 = sadd.s32 1, %s23
      %s35 = scalar_select %p32, %s34, %s23
      %p36 = scmp.ge.s32.totalorder %s35, 2
      %s37 = scalar_select %p36, 0, %s35
      %s38 = sadd.s32 1, %s22
      %s39 = scalar_select %p36, %s38, %s22
      %p40 = scmp.ge.s32.totalorder %s39, 1
      %s41 = scalar_select %p40, 0, %s39
      %s42 = ssub.s32 %s22, %s41
      %s43 = ssub.s32 %s24, %s33
      %s44 = sor.u32 %s42, %s43
      %p45 = scmp.eq.s32.totalorder %s44, 0
      %s47 = sadd.s32 %s46, 1
      %s48 = scalar_select %p45, %s46, %s47
      %p51 = pneg %p45
      %p52 = scmp.eq.s32.totalorder %s15, 1
      %p53 = por %p51, %p52
      %p54 = scmp.ne.s32.totalorder %s46, %s49
      %p55 = scmp.eq.s32.totalorder %s15, 0
      %p56 = por %p54, %p55
      %p57 = scmp.ne.s32.totalorder %s46, %s49
      %p58 = scmp.eq.s32.totalorder %s20, 1
      %p59 = por %p57, %p58
      %p60 = scmp.ne.s32.totalorder %s49, %s50
      %p61 = scmp.eq.s32.totalorder %s20, 0
      %p62 = por %p60, %p61
      %p63 = scmp.ne.s32.totalorder %s49, %s50
      %p64 = scmp.eq.s32.totalorder %s21, 1
      %p65 = por %p63, %p64
      %p67 = scmp.ne.s32.totalorder %s50, %s66
      %p68 = scmp.eq.s32.totalorder %s21, 0
      %p69 = por %p67, %p68
      %s70 = ssub.s32 %s23, %s37
      %s71 = ssub.s32 %s24, %s33
      %s72 = sor.u32 %s70, %s71
      %p73 = scmp.eq.s32.totalorder %s72, 0
      %s75 = sadd.s32 %s74, 1
      %s76 = scalar_select %p73, %s74, %s75
      %p79 = pneg %p73
      %p80 = scmp.eq.s32.totalorder %s15, 1
      %p81 = por %p79, %p80
      %p82 = scmp.ne.s32.totalorder %s74, %s77
      %p83 = scmp.eq.s32.totalorder %s15, 0
      %p84 = por %p82, %p83
      %p85 = scmp.ne.s32.totalorder %s74, %s77
      %p86 = scmp.eq.s32.totalorder %s20, 1
      %p87 = por %p85, %p86
      %p88 = scmp.ne.s32.totalorder %s77, %s78
      %p89 = scmp.eq.s32.totalorder %s20, 0
      %p90 = por %p88, %p89
      %p91 = scmp.ne.s32.totalorder %s77, %s78
      %p92 = scmp.eq.s32.totalorder %s21, 1
      %p93 = por %p91, %p92
      %p95 = scmp.ne.s32.totalorder %s78, %s94
      %p96 = scmp.eq.s32.totalorder %s21, 0
      %p97 = por %p95, %p96
      %s98 = ssub.s32 %s22, %s41
      %s99 = ssub.s32 %s23, %s37
      %s100 = sor.u32 %s98, %s99
      %p101 = scmp.eq.s32.totalorder %s100, 0
      %s103 = sadd.s32 %s102, 1
      %s104 = scalar_select %p101, %s102, %s103
      %p107 = pneg %p101
      %p108 = scmp.eq.s32.totalorder %s15, 1
      %p109 = por %p107, %p108
      %p110 = scmp.ne.s32.totalorder %s102, %s105
      %p111 = scmp.eq.s32.totalorder %s15, 0
      %p112 = por %p110, %p111
      %p113 = scmp.ne.s32.totalorder %s102, %s105
      %p114 = scmp.eq.s32.totalorder %s20, 1
      %p115 = por %p113, %p114
      %p116 = scmp.ne.s32.totalorder %s105, %s106
      %p117 = scmp.eq.s32.totalorder %s20, 0
      %p118 = por %p116, %p117
      %p119 = scmp.ne.s32.totalorder %s105, %s106
      %p120 = scmp.eq.s32.totalorder %s21, 1
      %p121 = por %p119, %p120
      %p123 = scmp.ne.s32.totalorder %s106, %s122
      %p124 = scmp.eq.s32.totalorder %s21, 0
      %p125 = por %p123, %p124
      %p126 = scmp.le.s32.totalorder 1, %s15
      %p127 = scmp.lt.s32.totalorder %s15, 3
      %p128 = pnand %p126, %p127
      %p129 = pneg %p128
      // Predicated region
      $region9: #{tpu_custom_call.1} parent=5 // pred_check
        _
      $region10: #{tpu_custom_call.1} parent=5 // pred_check_branch
        %131 = sbr.rel (%p128) target = $region12
      $region11: #{tpu_custom_call.1} parent=5 // pred_region
        %s132 = ssub.s32 %s15, 1
        // Predicated region
        $region13: #{tpu_custom_call.1} parent=11 // pred_check
          %p133 = pneg %p62
        $region14: #{tpu_custom_call.1} parent=11 // pred_check_branch
          %135 = sbr.rel (%p133) target = $region16
        $region15: #{tpu_custom_call.1} parent=11 // pred_region
          %s136 = smul.u32 4, %s25
          %s137 = smul.u32 8, %s27
          %s138 = ssub.s32 1, %s136
          %s139 = smul.u32 32, %s138
          %s140 = smul.u32 %s139, 8
          %s142 = ssub.s32 1024, %s140
          %143 = vsyncadd [#allocation3], %s142
          %p144 = scmp.ne.s32.totalorder 0, %s140
          %s145 = smul.addr %s136, 8
          %s146 = sadd.s32 %s137, %s145
          %s147 = smul.addr %s146, 32
          %s148 = scalar_lea.hbm %s0, %s147
          %s149 = smul.u32 16, %s138
          %s150 = sshll.u32 [#allocation2], 4
          %s151 = int_to_ptr.vmem [resolvable:$true] %s150
          %s152 = sshll.u32 %s149, 4
          %156 = dma.hbm_to_vmem [thread:$0]  (%p144), %s148, %s152, %s151, [#allocation3], 256, 256, 16
        $region16: #{tpu_custom_call.1} parent=11 // pred_fallthru
          _
      $region12: #{tpu_custom_call.1} parent=5 // pred_fallthru
        _
      %p157 = scmp.lt.s32.totalorder %s15, 2
      // Predicated region
      $region17: #{tpu_custom_call.1} parent=5 // pred_check
        %p158 = pneg %p157
      $region18: #{tpu_custom_call.1} parent=5 // pred_check_branch
        %160 = sbr.rel (%p158) target = $region20
      $region19: #{tpu_custom_call.1} parent=5 // pred_region
        // Predicated region
        $region21: #{tpu_custom_call.1} parent=19 // pred_check
          %p161 = pneg %p84
        $region22: #{tpu_custom_call.1} parent=19 // pred_check_branch
          %163 = sbr.rel (%p161) target = $region24
        $region23: #{tpu_custom_call.1} parent=19 // pred_region
          %s164 = sand.u32 %s74, 1
          %s165 = scalar_lea.sflag [#allocation6], %s164
          %s166 = sand.u32 %s74, 1
          %s167 = smul.addr %s166, 1024
          %s168 = scalar_lea.vmem [#allocation5], %s167
          %s169 = smul.u32 16, %s23
          %s170 = smul.u32 8, %s24
          %s172 = ssub.s32 16384, 16384
          %173 = vsyncadd %s165, %s172
          %s174 = smul.addr %s169, 8
          %s175 = sadd.s32 %s170, %s174
          %s176 = smul.addr %s175, 128
          %s177 = scalar_lea.hbm %s1, %s176
          %s178 = sshll.u32 %s168, 4
          %s179 = int_to_ptr.vmem [resolvable:$true] %s178
          %184 = dma.hbm_to_vmem [thread:$0]  %s177, 16384, %s179, %s165, 1024, 1024, 64
        $region24: #{tpu_custom_call.1} parent=19 // pred_fallthru
          _
      $region20: #{tpu_custom_call.1} parent=5 // pred_fallthru
        _
      %p185 = scmp.le.s32.totalorder 1, %s15
      %p186 = scmp.lt.s32.totalorder %s15, 3
      %p187 = pnand %p185, %p186
      %p188 = pneg %p187
      // Predicated region
      $region25: #{tpu_custom_call.1} parent=5 // pred_check
        _
      $region26: #{tpu_custom_call.1} parent=5 // pred_check_branch
        %190 = sbr.rel (%p187) target = $region28
      $region27: #{tpu_custom_call.1} parent=5 // pred_region
        %s191 = ssub.s32 %s15, 1
        // Predicated region
        $region29: #{tpu_custom_call.1} parent=27 // pred_check
          %p192 = pneg %p62
        $region30: #{tpu_custom_call.1} parent=27 // pred_check_branch
          %194 = sbr.rel (%p192) target = $region32
        $region31: #{tpu_custom_call.1} parent=27 // pred_region
          %195 = dma.done [#allocation3], 1024
        $region32: #{tpu_custom_call.1} parent=27 // pred_fallthru
          _
        %s196 = sand.u32 %s77, 1
        %s197 = scalar_lea.sflag [#allocation6], %s196
        %s198 = sand.u32 %s77, 1
        %s199 = smul.addr %s198, 1024
        %s200 = scalar_lea.vmem [#allocation5], %s199
        // Predicated region
        $region33: #{tpu_custom_call.1} parent=27 // pred_check
          %p201 = pneg %p90
        $region34: #{tpu_custom_call.1} parent=27 // pred_check_branch
          %203 = sbr.rel (%p201) target = $region36
        $region35: #{tpu_custom_call.1} parent=27 // pred_region
          %204 = dma.done %s197, 16384
        $region36: #{tpu_custom_call.1} parent=27 // pred_fallthru
          _
        %p205 = pneg %p62
        %p206 = pneg %p59
        %s207 = sand.u32 %s77, 1
        %s208 = scalar_lea.sflag [#allocation6], %s207
        %s209 = sand.u32 %s77, 1
        %s210 = smul.addr %s209, 1024
        %s211 = scalar_lea.vmem [#allocation5], %s210
        %p212 = pneg %p90
        %p213 = pneg %p87
        %p214 = pneg %p118
        %p215 = pneg %p115
        %s216 = sand.u32 %s105, 1
        %s217 = scalar_lea.sflag [#allocation4], %s216
        %s218 = sand.u32 %s105, 1
        %s219 = smul.addr %s218, 8
        %s220 = scalar_lea.vmem [#allocation7], %s219
        %s221 = smul.u32 4, %s25
        %s222 = smul.u32 8, %s27
        %s223 = ssub.s32 1, %s221
        %s224 = smul.u32 32, %s223
        %s225 = smul.u32 %s224, 8
        %s226 = smul.u32 16, %s26
        %s227 = smul.u32 8, %s27
        %s228 = smul.u32 4, %s25
        %s229 = ssub.s32 1, %s228
        %s230 = smul.u32 32, %s229
        %p231 = scmp.eq.s32.totalorder %s27, 0
        // Predicated region
        $region37: #{tpu_custom_call.1} parent=27 // pred_check
          %p232 = pneg %p231
        $region38: #{tpu_custom_call.1} parent=27 // pred_check_branch
          %234 = sbr.rel (%p232) target = $region40
        $region39: #{tpu_custom_call.1} parent=27 // pred_region
          %235 = vst [vmem:[%s220] sm:$0xff] 0.0
        $region40: #{tpu_custom_call.1} parent=27 // pred_fallthru
          _
        %v236 = vld [vmem:[%s220] sm:$0xff]
        %v237 = vld [vmem:[#allocation2] sm:$0xff]
        %v238 = vld [vmem:[#allocation2 + $0x8] sm:$0xff]
        %v239 = vld [vmem:[#allocation2 + $0x10] sm:$0xff]
        %v240 = vld [vmem:[#allocation2 + $0x18] sm:$0xff]
        %v241 = vld [vmem:[#allocation2 + $0x20] sm:$0xff]
        %v242 = vld [vmem:[#allocation2 + $0x28] sm:$0xff]
        %v243 = vld [vmem:[#allocation2 + $0x30] sm:$0xff]
        %v244 = vld [vmem:[#allocation2 + $0x38] sm:$0xff]
        %v245 = vld [vmem:[%s200] sm:$0xff]
        %v246 = vld [vmem:[%s200 + $0x8] sm:$0xff]
        %v247 = vld [vmem:[%s200 + $0x10] sm:$0xff]
        %v248 = vld [vmem:[%s200 + $0x18] sm:$0xff]
        %v249 = vld [vmem:[%s200 + $0x20] sm:$0xff]
        %v250 = vld [vmem:[%s200 + $0x28] sm:$0xff]
        %v251 = vld [vmem:[%s200 + $0x30] sm:$0xff]
        %v252 = vld [vmem:[%s200 + $0x38] sm:$0xff]
        %v253 = vld [vmem:[%s200 + $0x40] sm:$0xff]
        %v254 = vld [vmem:[%s200 + $0x48] sm:$0xff]
        %v255 = vld [vmem:[%s200 + $0x50] sm:$0xff]
        %v256 = vld [vmem:[%s200 + $0x58] sm:$0xff]
        %v257 = vld [vmem:[%s200 + $0x60] sm:$0xff]
        %v258 = vld [vmem:[%s200 + $0x68] sm:$0xff]
        %v259 = vld [vmem:[%s200 + $0x70] sm:$0xff]
        %v260 = vld [vmem:[%s200 + $0x78] sm:$0xff]
        %v261 = vld [vmem:[%s200 + $0x80] sm:$0xff]
        %v262 = vld [vmem:[%s200 + $0x88] sm:$0xff]
        %v263 = vld [vmem:[%s200 + $0x90] sm:$0xff]
        %v264 = vld [vmem:[%s200 + $0x98] sm:$0xff]
        %v265 = vld [vmem:[%s200 + $0xa0] sm:$0xff]
        %v266 = vld [vmem:[%s200 + $0xa8] sm:$0xff]
        %v267 = vld [vmem:[%s200 + $0xb0] sm:$0xff]
        %v268 = vld [vmem:[%s200 + $0xb8] sm:$0xff]
        %v269 = vld [vmem:[%s200 + $0xc0] sm:$0xff]
        %v270 = vld [vmem:[%s200 + $0xc8] sm:$0xff]
        %v271 = vld [vmem:[%s200 + $0xd0] sm:$0xff]
        %v272 = vld [vmem:[%s200 + $0xd8] sm:$0xff]
        %v273 = vld [vmem:[%s200 + $0xe0] sm:$0xff]
        %v274 = vld [vmem:[%s200 + $0xe8] sm:$0xff]
        %v275 = vld [vmem:[%s200 + $0xf0] sm:$0xff]
        %v276 = vld [vmem:[%s200 + $0xf8] sm:$0xff]
        %v277 = vld [vmem:[%s200 + $0x100] sm:$0xff]
        %v278 = vld [vmem:[%s200 + $0x108] sm:$0xff]
        %v279 = vld [vmem:[%s200 + $0x110] sm:$0xff]
        %v280 = vld [vmem:[%s200 + $0x118] sm:$0xff]
        %v281 = vld [vmem:[%s200 + $0x120] sm:$0xff]
        %v282 = vld [vmem:[%s200 + $0x128] sm:$0xff]
        %v283 = vld [vmem:[%s200 + $0x130] sm:$0xff]
        %v284 = vld [vmem:[%s200 + $0x138] sm:$0xff]
        %v285 = vld [vmem:[%s200 + $0x140] sm:$0xff]
        %v286 = vld [vmem:[%s200 + $0x148] sm:$0xff]
        %v287 = vld [vmem:[%s200 + $0x150] sm:$0xff]
        %v288 = vld [vmem:[%s200 + $0x158] sm:$0xff]
        %v289 = vld [vmem:[%s200 + $0x160] sm:$0xff]
        %v290 = vld [vmem:[%s200 + $0x168] sm:$0xff]
        %v291 = vld [vmem:[%s200 + $0x170] sm:$0xff]
        %v292 = vld [vmem:[%s200 + $0x178] sm:$0xff]
        %v293 = vld [vmem:[%s200 + $0x180] sm:$0xff]
        %v294 = vld [vmem:[%s200 + $0x188] sm:$0xff]
        %v295 = vld [vmem:[%s200 + $0x190] sm:$0xff]
        %v296 = vld [vmem:[%s200 + $0x198] sm:$0xff]
        %v297 = vld [vmem:[%s200 + $0x1a0] sm:$0xff]
        %v298 = vld [vmem:[%s200 + $0x1a8] sm:$0xff]
        %v299 = vld [vmem:[%s200 + $0x1b0] sm:$0xff]
        %v300 = vld [vmem:[%s200 + $0x1b8] sm:$0xff]
        %v301 = vld [vmem:[%s200 + $0x1c0] sm:$0xff]
        %v302 = vld [vmem:[%s200 + $0x1c8] sm:$0xff]
        %v303 = vld [vmem:[%s200 + $0x1d0] sm:$0xff]
        %v304 = vld [vmem:[%s200 + $0x1d8] sm:$0xff]
        %v305 = vld [vmem:[%s200 + $0x1e0] sm:$0xff]
        %v306 = vld [vmem:[%s200 + $0x1e8] sm:$0xff]
        %v307 = vld [vmem:[%s200 + $0x1f0] sm:$0xff]
        %v308 = vld [vmem:[%s200 + $0x1f8] sm:$0xff]
        %v309 = vld [vmem:[%s200 + $0x200] sm:$0xff]
        %v310 = vld [vmem:[%s200 + $0x208] sm:$0xff]
        %v311 = vld [vmem:[%s200 + $0x210] sm:$0xff]
        %v312 = vld [vmem:[%s200 + $0x218] sm:$0xff]
        %v313 = vld [vmem:[%s200 + $0x220] sm:$0xff]
        %v314 = vld [vmem:[%s200 + $0x228] sm:$0xff]
        %v315 = vld [vmem:[%s200 + $0x230] sm:$0xff]
        %v316 = vld [vmem:[%s200 + $0x238] sm:$0xff]
        %v317 = vld [vmem:[%s200 + $0x240] sm:$0xff]
        %v318 = vld [vmem:[%s200 + $0x248] sm:$0xff]
        %v319 = vld [vmem:[%s200 + $0x250] sm:$0xff]
        %v320 = vld [vmem:[%s200 + $0x258] sm:$0xff]
        %v321 = vld [vmem:[%s200 + $0x260] sm:$0xff]
        %v322 = vld [vmem:[%s200 + $0x268] sm:$0xff]
        %v323 = vld [vmem:[%s200 + $0x270] sm:$0xff]
        %v324 = vld [vmem:[%s200 + $0x278] sm:$0xff]
        %v325 = vld [vmem:[%s200 + $0x280] sm:$0xff]
        %v326 = vld [vmem:[%s200 + $0x288] sm:$0xff]
        %v327 = vld [vmem:[%s200 + $0x290] sm:$0xff]
        %v328 = vld [vmem:[%s200 + $0x298] sm:$0xff]
        %v329 = vld [vmem:[%s200 + $0x2a0] sm:$0xff]
        %v330 = vld [vmem:[%s200 + $0x2a8] sm:$0xff]
        %v331 = vld [vmem:[%s200 + $0x2b0] sm:$0xff]
        %v332 = vld [vmem:[%s200 + $0x2b8] sm:$0xff]
        %v333 = vld [vmem:[%s200 + $0x2c0] sm:$0xff]
        %v334 = vld [vmem:[%s200 + $0x2c8] sm:$0xff]
        %v335 = vld [vmem:[%s200 + $0x2d0] sm:$0xff]
        %v336 = vld [vmem:[%s200 + $0x2d8] sm:$0xff]
        %v337 = vld [vmem:[%s200 + $0x2e0] sm:$0xff]
        %v338 = vld [vmem:[%s200 + $0x2e8] sm:$0xff]
        %v339 = vld [vmem:[%s200 + $0x2f0] sm:$0xff]
        %v340 = vld [vmem:[%s200 + $0x2f8] sm:$0xff]
        %v341 = vld [vmem:[%s200 + $0x300] sm:$0xff]
        %v342 = vld [vmem:[%s200 + $0x308] sm:$0xff]
        %v343 = vld [vmem:[%s200 + $0x310] sm:$0xff]
        %v344 = vld [vmem:[%s200 + $0x318] sm:$0xff]
        %v345 = vld [vmem:[%s200 + $0x320] sm:$0xff]
        %v346 = vld [vmem:[%s200 + $0x328] sm:$0xff]
        %v347 = vld [vmem:[%s200 + $0x330] sm:$0xff]
        %v348 = vld [vmem:[%s200 + $0x338] sm:$0xff]
        %v349 = vld [vmem:[%s200 + $0x340] sm:$0xff]
        %v350 = vld [vmem:[%s200 + $0x348] sm:$0xff]
        %v351 = vld [vmem:[%s200 + $0x350] sm:$0xff]
        %v352 = vld [vmem:[%s200 + $0x358] sm:$0xff]
        %v353 = vld [vmem:[%s200 + $0x360] sm:$0xff]
        %v354 = vld [vmem:[%s200 + $0x368] sm:$0xff]
        %v355 = vld [vmem:[%s200 + $0x370] sm:$0xff]
        %v356 = vld [vmem:[%s200 + $0x378] sm:$0xff]
        %v357 = vld [vmem:[%s200 + $0x380] sm:$0xff]
        %v358 = vld [vmem:[%s200 + $0x388] sm:$0xff]
        %v359 = vld [vmem:[%s200 + $0x390] sm:$0xff]
        %v360 = vld [vmem:[%s200 + $0x398] sm:$0xff]
        %v361 = vld [vmem:[%s200 + $0x3a0] sm:$0xff]
        %v362 = vld [vmem:[%s200 + $0x3a8] sm:$0xff]
        %v363 = vld [vmem:[%s200 + $0x3b0] sm:$0xff]
        %v364 = vld [vmem:[%s200 + $0x3b8] sm:$0xff]
        %v365 = vld [vmem:[%s200 + $0x3c0] sm:$0xff]
        %v366 = vld [vmem:[%s200 + $0x3c8] sm:$0xff]
        %v367 = vld [vmem:[%s200 + $0x3d0] sm:$0xff]
        %v368 = vld [vmem:[%s200 + $0x3d8] sm:$0xff]
        %v369 = vld [vmem:[%s200 + $0x3e0] sm:$0xff]
        %v370 = vld [vmem:[%s200 + $0x3e8] sm:$0xff]
        %v371 = vld [vmem:[%s200 + $0x3f0] sm:$0xff]
        %v372 = vld [vmem:[%s200 + $0x3f8] sm:$0xff]
        %v381 = vcombine.low %v237, %v239
        %v382 = vcombine.high %v237, %v239
        %v383 = vcombine.low %v241, %v243
        %v384 = vcombine.high %v241, %v243
        %v386 = vunpack.c.l.s4 1983009808
        %v387 = vunpack.c.0.s8 %v386
        %v388 = vlaneseq
        %v389 = vshrl.u32 %v388, 7
        %v390 = vsub.s32 %v387, %v389
        %v391 = vrot.slane %v381, %v390
        %v393 = vunpack.c.l.s4 1983009808
        %v394 = vunpack.c.0.s8 %v393
        %v395 = vlaneseq
        %v396 = vshrl.u32 %v395, 7
        %v397 = vsub.s32 %v394, %v396
        %v398 = vrot.slane %v382, %v397
        %v400 = vunpack.c.l.s4 1983009808
        %v401 = vunpack.c.0.s8 %v400
        %v402 = vlaneseq
        %v403 = vshrl.u32 %v402, 7
        %v404 = vsub.s32 %v401, %v403
        %v405 = vrot.slane %v383, %v404
        %v407 = vunpack.c.l.s4 1983009808
        %v408 = vunpack.c.0.s8 %v407
        %v409 = vlaneseq
        %v410 = vshrl.u32 %v409, 7
        %v411 = vsub.s32 %v408, %v410
        %v412 = vrot.slane %v384, %v411
        %v413 = vcombine.low %v391, %v405
        %v414 = vcombine.high %v391, %v405
        %v415 = vcombine.low %v398, %v412
        %v416 = vcombine.high %v398, %v412
        %v417 = vcombine.low %v238, %v240
        %v418 = vcombine.high %v238, %v240
        %v419 = vcombine.low %v242, %v244
        %v420 = vcombine.high %v242, %v244
        %v422 = vunpack.c.l.s4 1983009808
        %v423 = vunpack.c.0.s8 %v422
        %v424 = vlaneseq
        %v425 = vshrl.u32 %v424, 7
        %v426 = vsub.s32 %v423, %v425
        %v427 = vrot.slane %v417, %v426
        %v429 = vunpack.c.l.s4 1983009808
        %v430 = vunpack.c.0.s8 %v429
        %v431 = vlaneseq
        %v432 = vshrl.u32 %v431, 7
        %v433 = vsub.s32 %v430, %v432
        %v434 = vrot.slane %v418, %v433
        %v436 = vunpack.c.l.s4 1983009808
        %v437 = vunpack.c.0.s8 %v436
        %v438 = vlaneseq
        %v439 = vshrl.u32 %v438, 7
        %v440 = vsub.s32 %v437, %v439
        %v441 = vrot.slane %v419, %v440
        %v443 = vunpack.c.l.s4 1983009808
        %v444 = vunpack.c.0.s8 %v443
        %v445 = vlaneseq
        %v446 = vshrl.u32 %v445, 7
        %v447 = vsub.s32 %v444, %v446
        %v448 = vrot.slane %v420, %v447
        %v449 = vcombine.low %v427, %v441
        %v450 = vcombine.high %v427, %v441
        %v451 = vcombine.low %v434, %v448
        %v452 = vcombine.high %v434, %v448
        %461 = vmatprep.subr.mxu0 %v246
        %462 = vmatpush1.xpose.msra.mxu0 %v245
        %463 = vmatprep.subr.mxu0 %v254
        %464 = vmatpush1.xpose.msra.mxu0 %v253
        %465 = vmatprep.subr.mxu0 %v262
        %466 = vmatpush1.xpose.msra.mxu0 %v261
        %467 = vmatprep.subr.mxu0 %v270
        %468 = vmatpush1.xpose.msra.mxu0 %v269
        %469 = vmatprep.subr.mxu0 %v278
        %470 = vmatpush1.xpose.msra.mxu0 %v277
        %471 = vmatprep.subr.mxu0 %v286
        %472 = vmatpush1.xpose.msra.mxu0 %v285
        %473 = vmatprep.subr.mxu0 %v294
        %474 = vmatpush1.xpose.msra.mxu0 %v293
        %475 = vmatprep.subr.mxu0 %v302
        %476 = vmatpush1.xpose.msra.mxu0 %v301
        %477 = vmatprep.subr.mxu0 %v310
        %478 = vmatpush1.xpose.msra.mxu0 %v309
        %479 = vmatprep.subr.mxu0 %v318
        %480 = vmatpush1.xpose.msra.mxu0 %v317
        %481 = vmatprep.subr.mxu0 %v326
        %482 = vmatpush1.xpose.msra.mxu0 %v325
        %483 = vmatprep.subr.mxu0 %v334
        %484 = vmatpush1.xpose.msra.mxu0 %v333
        %485 = vmatprep.subr.mxu0 %v342
        %486 = vmatpush1.xpose.msra.mxu0 %v341
        %487 = vmatprep.subr.mxu0 %v350
        %488 = vmatpush1.xpose.msra.mxu0 %v349
        %489 = vmatprep.subr.mxu0 %v358
        %490 = vmatpush1.xpose.msra.mxu0 %v357
        %491 = vmatprep.subr.mxu0 %v366
        %492 = vmatpush1.xpose.msra.mxu0 %v365
        %493 = vmatprep.subr.mxu0 0.0
        %494 = vmatpush1.xpose.msra.mxu0 0.0
        %495 = vmatprep.subr.mxu0 0.0
        %496 = vmatpush1.xpose.msra.mxu0 0.0
        %497 = vmatprep.subr.mxu0 0.0
        %498 = vmatpush1.xpose.msra.mxu0 0.0
        %499 = vmatprep.subr.mxu0 0.0
        %500 = vmatpush1.xpose.msra.mxu0 0.0
        %501 = vmatprep.subr.mxu0 0.0
        %502 = vmatpush1.xpose.msra.mxu0 0.0
        %503 = vmatprep.subr.mxu0 0.0
        %504 = vmatpush1.xpose.msra.mxu0 0.0
        %505 = vmatprep.subr.mxu0 0.0
        %506 = vmatpush1.xpose.msra.mxu0 0.0
        %507 = vmatprep.subr.mxu0 0.0
        %508 = vmatpush1.xpose.msra.mxu0 0.0
        %509 = vmatprep.subr.mxu0 0.0
        %510 = vmatpush1.xpose.msra.mxu0 0.0
        %511 = vmatprep.subr.mxu0 0.0
        %512 = vmatpush1.xpose.msra.mxu0 0.0
        %513 = vmatprep.subr.mxu0 0.0
        %514 = vmatpush1.xpose.msra.mxu0 0.0
        %515 = vmatprep.subr.mxu0 0.0
        %516 = vmatpush1.xpose.msra.mxu0 0.0
        %517 = vmatprep.subr.mxu0 0.0
        %518 = vmatpush1.xpose.msra.mxu0 0.0
        %519 = vmatprep.subr.mxu0 0.0
        %520 = vmatpush1.xpose.msra.mxu0 0.0
        %521 = vmatprep.subr.mxu0 0.0
        %522 = vmatpush1.xpose.msra.mxu0 0.0
        %523 = vmatprep.subr.mxu0 0.0
        %524 = vmatpush1.xpose.msra.mxu0 0.0
        %525 = vmatprep.mubr.f32.mxu0 %v414
        %526 = vmatmul.mubr.f32.gmra.mrb[0].mxu0 %v413
        %v527 = vpop.f32.mrb[0].mxu0
        %v528 = vadd.f32 0.0, %v527
        %v529 = vpop.f32.mrb[0].mxu0
        %530 = vdwg.mxu0
        %531 = vmatprep.subr.mxu0 %v248
        %532 = vmatpush1.xpose.msra.mxu0 %v247
        %533 = vmatprep.subr.mxu0 %v256
        %534 = vmatpush1.xpose.msra.mxu0 %v255
        %535 = vmatprep.subr.mxu0 %v264
        %536 = vmatpush1.xpose.msra.mxu0 %v263
        %537 = vmatprep.subr.mxu0 %v272
        %538 = vmatpush1.xpose.msra.mxu0 %v271
        %539 = vmatprep.subr.mxu0 %v280
        %540 = vmatpush1.xpose.msra.mxu0 %v279
        %541 = vmatprep.subr.mxu0 %v288
        %542 = vmatpush1.xpose.msra.mxu0 %v287
        %543 = vmatprep.subr.mxu0 %v296
        %544 = vmatpush1.xpose.msra.mxu0 %v295
        %545 = vmatprep.subr.mxu0 %v304
        %546 = vmatpush1.xpose.msra.mxu0 %v303
        %547 = vmatprep.subr.mxu0 %v312
        %548 = vmatpush1.xpose.msra.mxu0 %v311
        %549 = vmatprep.subr.mxu0 %v320
        %550 = vmatpush1.xpose.msra.mxu0 %v319
        %551 = vmatprep.subr.mxu0 %v328
        %552 = vmatpush1.xpose.msra.mxu0 %v327
        %553 = vmatprep.subr.mxu0 %v336
        %554 = vmatpush1.xpose.msra.mxu0 %v335
        %555 = vmatprep.subr.mxu0 %v344
        %556 = vmatpush1.xpose.msra.mxu0 %v343
        %557 = vmatprep.subr.mxu0 %v352
        %558 = vmatpush1.xpose.msra.mxu0 %v351
        %559 = vmatprep.subr.mxu0 %v360
        %560 = vmatpush1.xpose.msra.mxu0 %v359
        %561 = vmatprep.subr.mxu0 %v368
        %562 = vmatpush1.xpose.msra.mxu0 %v367
        %563 = vmatprep.subr.mxu0 0.0
        %564 = vmatpush1.xpose.msra.mxu0 0.0
        %565 = vmatprep.subr.mxu0 0.0
        %566 = vmatpush1.xpose.msra.mxu0 0.0
        %567 = vmatprep.subr.mxu0 0.0
        %568 = vmatpush1.xpose.msra.mxu0 0.0
        %569 = vmatprep.subr.mxu0 0.0
        %570 = vmatpush1.xpose.msra.mxu0 0.0
        %571 = vmatprep.subr.mxu0 0.0
        %572 = vmatpush1.xpose.msra.mxu0 0.0
        %573 = vmatprep.subr.mxu0 0.0
        %574 = vmatpush1.xpose.msra.mxu0 0.0
        %575 = vmatprep.subr.mxu0 0.0
        %576 = vmatpush1.xpose.msra.mxu0 0.0
        %577 = vmatprep.subr.mxu0 0.0
        %578 = vmatpush1.xpose.msra.mxu0 0.0
        %579 = vmatprep.subr.mxu0 0.0
        %580 = vmatpush1.xpose.msra.mxu0 0.0
        %581 = vmatprep.subr.mxu0 0.0
        %582 = vmatpush1.xpose.msra.mxu0 0.0
        %583 = vmatprep.subr.mxu0 0.0
        %584 = vmatpush1.xpose.msra.mxu0 0.0
        %585 = vmatprep.subr.mxu0 0.0
        %586 = vmatpush1.xpose.msra.mxu0 0.0
        %587 = vmatprep.subr.mxu0 0.0
        %588 = vmatpush1.xpose.msra.mxu0 0.0
        %589 = vmatprep.subr.mxu0 0.0
        %590 = vmatpush1.xpose.msra.mxu0 0.0
        %591 = vmatprep.subr.mxu0 0.0
        %592 = vmatpush1.xpose.msra.mxu0 0.0
        %593 = vmatprep.subr.mxu0 0.0
        %594 = vmatpush1.xpose.msra.mxu0 0.0
        %595 = vmatprep.mubr.f32.mxu0 %v416
        %596 = vmatmul.mubr.f32.gmra.mrb[0].mxu0 %v415
        %v597 = vpop.f32.mrb[0].mxu0
        %v598 = vadd.f32 %v528, %v597
        %v599 = vpop.f32.mrb[0].mxu0
        %600 = vdwg.mxu0
        %601 = vmatprep.subr.mxu0 %v250
        %602 = vmatpush1.xpose.msra.mxu0 %v249
        %603 = vmatprep.subr.mxu0 %v258
        %604 = vmatpush1.xpose.msra.mxu0 %v257
        %605 = vmatprep.subr.mxu0 %v266
        %606 = vmatpush1.xpose.msra.mxu0 %v265
        %607 = vmatprep.subr.mxu0 %v274
        %608 = vmatpush1.xpose.msra.mxu0 %v273
        %609 = vmatprep.subr.mxu0 %v282
        %610 = vmatpush1.xpose.msra.mxu0 %v281
        %611 = vmatprep.subr.mxu0 %v290
        %612 = vmatpush1.xpose.msra.mxu0 %v289
        %613 = vmatprep.subr.mxu0 %v298
        %614 = vmatpush1.xpose.msra.mxu0 %v297
        %615 = vmatprep.subr.mxu0 %v306
        %616 = vmatpush1.xpose.msra.mxu0 %v305
        %617 = vmatprep.subr.mxu0 %v314
        %618 = vmatpush1.xpose.msra.mxu0 %v313
        %619 = vmatprep.subr.mxu0 %v322
        %620 = vmatpush1.xpose.msra.mxu0 %v321
        %621 = vmatprep.subr.mxu0 %v330
        %622 = vmatpush1.xpose.msra.mxu0 %v329
        %623 = vmatprep.subr.mxu0 %v338
        %624 = vmatpush1.xpose.msra.mxu0 %v337
        %625 = vmatprep.subr.mxu0 %v346
        %626 = vmatpush1.xpose.msra.mxu0 %v345
        %627 = vmatprep.subr.mxu0 %v354
        %628 = vmatpush1.xpose.msra.mxu0 %v353
        %629 = vmatprep.subr.mxu0 %v362
        %630 = vmatpush1.xpose.msra.mxu0 %v361
        %631 = vmatprep.subr.mxu0 %v370
        %632 = vmatpush1.xpose.msra.mxu0 %v369
        %633 = vmatprep.subr.mxu0 0.0
        %634 = vmatpush1.xpose.msra.mxu0 0.0
        %635 = vmatprep.subr.mxu0 0.0
        %636 = vmatpush1.xpose.msra.mxu0 0.0
        %637 = vmatprep.subr.mxu0 0.0
        %638 = vmatpush1.xpose.msra.mxu0 0.0
        %639 = vmatprep.subr.mxu0 0.0
        %640 = vmatpush1.xpose.msra.mxu0 0.0
        %641 = vmatprep.subr.mxu0 0.0
        %642 = vmatpush1.xpose.msra.mxu0 0.0
        %643 = vmatprep.subr.mxu0 0.0
        %644 = vmatpush1.xpose.msra.mxu0 0.0
        %645 = vmatprep.subr.mxu0 0.0
        %646 = vmatpush1.xpose.msra.mxu0 0.0
        %647 = vmatprep.subr.mxu0 0.0
        %648 = vmatpush1.xpose.msra.mxu0 0.0
        %649 = vmatprep.subr.mxu0 0.0
        %650 = vmatpush1.xpose.msra.mxu0 0.0
        %651 = vmatprep.subr.mxu0 0.0
        %652 = vmatpush1.xpose.msra.mxu0 0.0
        %653 = vmatprep.subr.mxu0 0.0
        %654 = vmatpush1.xpose.msra.mxu0 0.0
        %655 = vmatprep.subr.mxu0 0.0
        %656 = vmatpush1.xpose.msra.mxu0 0.0
        %657 = vmatprep.subr.mxu0 0.0
        %658 = vmatpush1.xpose.msra.mxu0 0.0
        %659 = vmatprep.subr.mxu0 0.0
        %660 = vmatpush1.xpose.msra.mxu0 0.0
        %661 = vmatprep.subr.mxu0 0.0
        %662 = vmatpush1.xpose.msra.mxu0 0.0
        %663 = vmatprep.subr.mxu0 0.0
        %664 = vmatpush1.xpose.msra.mxu0 0.0
        %665 = vmatprep.mubr.f32.mxu0 %v450
        %666 = vmatmul.mubr.f32.gmra.mrb[0].mxu0 %v449
        %v667 = vpop.f32.mrb[0].mxu0
        %v668 = vadd.f32 %v598, %v667
        %v669 = vpop.f32.mrb[0].mxu0
        %670 = vdwg.mxu0
        %671 = vmatprep.subr.mxu0 %v252
        %672 = vmatpush1.xpose.msra.mxu0 %v251
        %673 = vmatprep.subr.mxu0 %v260
        %674 = vmatpush1.xpose.msra.mxu0 %v259
        %675 = vmatprep.subr.mxu0 %v268
        %676 = vmatpush1.xpose.msra.mxu0 %v267
        %677 = vmatprep.subr.mxu0 %v276
        %678 = vmatpush1.xpose.msra.mxu0 %v275
        %679 = vmatprep.subr.mxu0 %v284
        %680 = vmatpush1.xpose.msra.mxu0 %v283
        %681 = vmatprep.subr.mxu0 %v292
        %682 = vmatpush1.xpose.msra.mxu0 %v291
        %683 = vmatprep.subr.mxu0 %v300
        %684 = vmatpush1.xpose.msra.mxu0 %v299
        %685 = vmatprep.subr.mxu0 %v308
        %686 = vmatpush1.xpose.msra.mxu0 %v307
        %687 = vmatprep.subr.mxu0 %v316
        %688 = vmatpush1.xpose.msra.mxu0 %v315
        %689 = vmatprep.subr.mxu0 %v324
        %690 = vmatpush1.xpose.msra.mxu0 %v323
        %691 = vmatprep.subr.mxu0 %v332
        %692 = vmatpush1.xpose.msra.mxu0 %v331
        %693 = vmatprep.subr.mxu0 %v340
        %694 = vmatpush1.xpose.msra.mxu0 %v339
        %695 = vmatprep.subr.mxu0 %v348
        %696 = vmatpush1.xpose.msra.mxu0 %v347
        %697 = vmatprep.subr.mxu0 %v356
        %698 = vmatpush1.xpose.msra.mxu0 %v355
        %699 = vmatprep.subr.mxu0 %v364
        %700 = vmatpush1.xpose.msra.mxu0 %v363
        %701 = vmatprep.subr.mxu0 %v372
        %702 = vmatpush1.xpose.msra.mxu0 %v371
        %703 = vmatprep.subr.mxu0 0.0
        %704 = vmatpush1.xpose.msra.mxu0 0.0
        %705 = vmatprep.subr.mxu0 0.0
        %706 = vmatpush1.xpose.msra.mxu0 0.0
        %707 = vmatprep.subr.mxu0 0.0
        %708 = vmatpush1.xpose.msra.mxu0 0.0
        %709 = vmatprep.subr.mxu0 0.0
        %710 = vmatpush1.xpose.msra.mxu0 0.0
        %711 = vmatprep.subr.mxu0 0.0
        %712 = vmatpush1.xpose.msra.mxu0 0.0
        %713 = vmatprep.subr.mxu0 0.0
        %714 = vmatpush1.xpose.msra.mxu0 0.0
        %715 = vmatprep.subr.mxu0 0.0
        %716 = vmatpush1.xpose.msra.mxu0 0.0
        %717 = vmatprep.subr.mxu0 0.0
        %718 = vmatpush1.xpose.msra.mxu0 0.0
        %719 = vmatprep.subr.mxu0 0.0
        %720 = vmatpush1.xpose.msra.mxu0 0.0
        %721 = vmatprep.subr.mxu0 0.0
        %722 = vmatpush1.xpose.msra.mxu0 0.0
        %723 = vmatprep.subr.mxu0 0.0
        %724 = vmatpush1.xpose.msra.mxu0 0.0
        %725 = vmatprep.subr.mxu0 0.0
        %726 = vmatpush1.xpose.msra.mxu0 0.0
        %727 = vmatprep.subr.mxu0 0.0
        %728 = vmatpush1.xpose.msra.mxu0 0.0
        %729 = vmatprep.subr.mxu0 0.0
        %730 = vmatpush1.xpose.msra.mxu0 0.0
        %731 = vmatprep.subr.mxu0 0.0
        %732 = vmatpush1.xpose.msra.mxu0 0.0
        %733 = vmatprep.subr.mxu0 0.0
        %734 = vmatpush1.xpose.msra.mxu0 0.0
        %735 = vmatprep.mubr.f32.mxu0 %v452
        %736 = vmatmul.mubr.f32.gmra.mrb[0].mxu0 %v451
        %v737 = vpop.f32.mrb[0].mxu0
        %v738 = vadd.f32 %v668, %v737
        %v739 = vpop.f32.mrb[0].mxu0
        %740 = vdwg.mxu0
        %v741 = vadd.f32 %v236, %v738
        %742 = vst [vmem:[%s220] sm:$0xff] %v741
        %s743 = sand.u32 %s105, 1
        %s744 = scalar_lea.sflag [#allocation4], %s743
        %s745 = sand.u32 %s105, 1
        %s746 = smul.addr %s745, 8
        %s747 = scalar_lea.vmem [#allocation7], %s746
        // Predicated region
        $region41: #{tpu_custom_call.1} parent=27 // pred_check
          %p748 = pneg %p115
        $region42: #{tpu_custom_call.1} parent=27 // pred_check_branch
          %750 = sbr.rel (%p748) target = $region44
        $region43: #{tpu_custom_call.1} parent=27 // pred_region
          %s751 = smul.u32 4, %s25
          %s752 = ssub.s32 1, %s751
          %s753 = smul.u32 32, %s752
          %s755 = ssub.s32 128, %s753
          %756 = vsyncadd %s744, %s755
          %p757 = scmp.ne.s32.totalorder 0, %s753
          %s758 = smul.addr %s751, 2
          %s759 = sadd.s32 %s26, %s758
          %s760 = smul.addr %s759, 32
          %s761 = scalar_lea.hbm %s2, %s760
          %s762 = smul.u32 2, %s752
          %s763 = sshll.u32 %s747, 4
          %s764 = int_to_ptr.vmem [resolvable:$true] %s763
          %s765 = sshll.u32 %s762, 4
          %769 = dma.vmem_to_hbm [thread:$0]  (%p757), %s764, %s765, %s761, %s744, 32, 64, 2
        $region44: #{tpu_custom_call.1} parent=27 // pred_fallthru
          _
      $region28: #{tpu_custom_call.1} parent=5 // pred_fallthru
        _
      %p770 = scmp.le.s32.totalorder 2, %s15
      // Predicated region
      $region45: #{tpu_custom_call.1} parent=5 // pred_check
        %p771 = pneg %p770
      $region46: #{tpu_custom_call.1} parent=5 // pred_check_branch
        %773 = sbr.rel (%p771) target = $region48
      $region47: #{tpu_custom_call.1} parent=5 // pred_region
        %s774 = ssub.s32 %s15, 2
        // Predicated region
        $region49: #{tpu_custom_call.1} parent=47 // pred_check
          %p775 = pneg %p121
        $region50: #{tpu_custom_call.1} parent=47 // pred_check_branch
          %777 = sbr.rel (%p775) target = $region52
        $region51: #{tpu_custom_call.1} parent=47 // pred_region
          %s778 = sand.u32 %s106, 1
          %s779 = scalar_lea.sflag [#allocation4], %s778
          %s780 = sand.u32 %s106, 1
          %s781 = smul.addr %s780, 8
          %s782 = scalar_lea.vmem [#allocation7], %s781
          %783 = dma.done %s779, 128
        $region52: #{tpu_custom_call.1} parent=47 // pred_fallthru
          _
      $region48: #{tpu_custom_call.1} parent=5 // pred_fallthru
        _
    $region6: #{tpu_custom_call.1} parent=1 // loop_footer
      %s19 = sadd.s32 1, %s15
    $region7: #{tpu_custom_call.1} parent=1 // loop_footer_branch
      %14 = sbr.rel target = $region3
    $region8: #{tpu_custom_call.1} parent=1 // loop_exit
      _
    %784 = vsyncpa [#allocation3], 1
    %s785 = scalar_lea.sflag [#allocation3], 1
    %786 = vsyncpa %s785, 1
    %787 = vsyncpa [#allocation6], 1
    %s788 = scalar_lea.sflag [#allocation6], 1
    %789 = vsyncpa %s788, 1
    %790 = vsyncpa [#allocation4], 1
    %s791 = scalar_lea.sflag [#allocation4], 1
    %792 = vsyncpa %s791, 1

</llo_original>
